<compile_context>
chip_gen: v5e
topology: v5e:2x2
jax: 0.10.0
libtpu: 0.0.40
codegen_flags: <defaults>
</compile_context>

<pallas_src>
import functools

import jax
import jax.numpy as jnp
from jax import lax
from jax.experimental import pallas as pl
from jax.experimental.pallas import tpu as pltpu


def _round_up(x, m):
    return (x + m - 1) // m * m


def _vmem_budget_bytes():
    """(tile budget, compiler vmem limit) sized for the local TPU generation."""
    cap = 64 * 1024 * 1024
    try:
        info = pltpu.get_tpu_info()
        cap = int(getattr(info, "vmem_capacity_bytes", cap))
    except Exception:
        pass
    if cap >= 128 * 1024 * 1024:          # v5e / v6e: 128 MiB physical VMEM
        return 80 * 1024 * 1024, 100 * 1024 * 1024
    # v7x-class part: 64 MiB per TensorCore -> stay conservative.
    return 24 * 1024 * 1024, 48 * 1024 * 1024


def _bf16_transcendentals_ok():
    """bf16 EUP (exp/tanh) only on v6e/v7x; v5e has no bf16 EUP/VPU."""
    try:
        kind = jax.devices()[0].device_kind.lower()
    except Exception:
        return False
    return ("v6" in kind) or ("v7" in kind) or ("7x" in kind)


def _choose_batch_block(B, St, Dp, Lt, out_itemsize, budget, require_two_steps):
    """Largest divisor of B whose VMEM working set fits the budget."""
    best = 1
    for d in range(1, B + 1):
        if B % d:
            continue
        if require_two_steps and B >= 2 and B // d < 2:
            # Only enforced on the 2-TC / 64 MiB part when the label axis has
            # a single tile, so both TensorCores still get work.
            continue
        est = (2 * 2 * d * St * Dp               # bf16 x block, double buffered
               + 2 * 2 * Dp * Lt                 # bf16 A block, double buffered
               + 2 * out_itemsize * d * Lt * Dp  # out block, double buffered
               + 4 * d * Lt * Dp                 # f32 numerator accumulator
               + 4 * d * Lt                      # f32 denominator accumulator
               + 3 * 4 * d * St * Lt)            # scores / e intermediates
        if est <= budget:
            best = d
    return best


def _mla_kernel(x_ref, a_ref, o_ref, acc_ref, den_ref, *,
                seq_len, seq_block, mask_seq, bf16_eup):
    # x_ref  : (Bt, St, Dp) bf16 x chunk (zero padded on S/D tails)
    # a_ref  : (Dp, Lt)     bf16 label-attention tile (zero padded)
    # o_ref  : (Bt, Lt, Dp) output tile (written once, on the last S chunk)
    # acc_ref: (Bt, Lt, Dp) f32 numerator accumulator
    # den_ref: (Bt, Lt)     f32 softmax-denominator accumulator
    s_idx = pl.program_id(2)

    @pl.when(s_idx == 0)
    def _init():
        acc_ref[...] = jnp.zeros_like(acc_ref)
        den_ref[...] = jnp.zeros_like(den_ref)

    x = x_ref[...]
    bt, st, dp = x.shape
    lt = a_ref.shape[1]

    # scores = x @ A: one fused (Bt*St, Dp) @ (Dp, Lt) bf16 MXU matmul, f32 acc.
    scores = jnp.dot(x.reshape(bt * st, dp), a_ref[...],
                     preferred_element_type=jnp.float32)

    # tanh bounds logits to (-1, 1) -> exp needs no max subtraction and the
    # softmax accumulates across S chunks without rescaling (tanh invariant!).
    if bf16_eup:    # v6e/v7x: bf16 EUP runs ~2x the f32 rate
        e = jnp.exp(jnp.tanh(scores.astype(jnp.bfloat16)))
    else:           # v5e: no bf16 EUP/VPU -> keep transcendentals in f32
        e = jnp.exp(jnp.tanh(scores)).astype(jnp.bfloat16)
    e = e.reshape(bt, st, lt)

    if mask_seq:
        # Zero the weights of zero-padded tail rows so they do not pollute the
        # softmax denominator (exp(tanh(0)) = 1).
        row = lax.broadcasted_iota(jnp.int32, (st, lt), 0)
        valid = row < (seq_len - s_idx * seq_block)
        e = jnp.where(valid[None, :, :], e, jnp.zeros_like(e))

    # Denominator: sum_s e[b, s, l] on the VPU/XLU (no extra MXU passes),
    # accumulated in f32 from the *same* bf16-quantised weights used in the
    # numerator so the quantisation error largely cancels in the final ratio.
    den_ref[...] += jnp.sum(e.astype(jnp.float32), axis=1)

    # Numerator: acc[b, l, :] += e[b, :, l]^T @ x[b] — one batched MXU matmul
    # and a single accumulator read-modify-write (no per-batch Python loop).
    acc_ref[...] += jnp.einsum("bsl,bsd->bld", e, x,
                               preferred_element_type=jnp.float32)

    @pl.when(s_idx == pl.num_programs(2) - 1)
    def _finalize():
        inv = 1.0 / den_ref[...]                         # exact; once per tile
        inv_b = lax.broadcast_in_dim(inv, (bt, lt, dp), (0, 1))
        o_ref[...] = (acc_ref[...] * inv_b).astype(o_ref.dtype)


def multi_label_attention(x, A, *, batch_block=None, seq_block=None,
                          label_block=None, out_dtype=None):
    """x: (B, S, D), A: (D, L) -> (B, L, D); matches the PyTorch module."""
    B, S, D = x.shape
    D2, L = A.shape
    assert D == D2, (D, D2)
    out_dtype = x.dtype if out_dtype is None else jnp.dtype(out_dtype)
    out_itemsize = jnp.dtype(out_dtype).itemsize

    budget, vmem_limit = _vmem_budget_bytes()
    big = budget >= 64 * 1024 * 1024

    # ---- lane/sublane-aligned padded shapes --------------------------------
    Dp = _round_up(D, 128)                       # no "+1" ones column any more
    Lt = _round_up(label_block if label_block is not None
                   else min(_round_up(L, 128), 1024 if big else 512), 128)
    Lp = _round_up(_round_up(L, 128), Lt)
    St = _round_up(seq_block if seq_block is not None
                   else min(_round_up(S, 16), 512 if big else 256), 16)
    Sp = _round_up(S, St)
    nl, ns = Lp // Lt, Sp // St

    if batch_block is not None:
        Bt = batch_block
        assert B % Bt == 0, (B, Bt)
    else:
        require_two = (not big) and (nl == 1)    # keep both v7x TCs busy
        Bt = _choose_batch_block(B, St, Dp, Lt, out_itemsize, budget, require_two)
    nb = B // Bt

    # ---- cast / pad inputs only when actually needed -----------------------
    cdt = jnp.bfloat16
    x_c = x if x.dtype == cdt else x.astype(cdt)
    if Sp != S or Dp != D:
        x_c = jnp.pad(x_c, ((0, 0), (0, Sp - S), (0, Dp - D)))
    a_c = A if A.dtype == cdt else A.astype(cdt)
    if Dp != D or Lp != L:
        a_c = jnp.pad(a_c, ((0, Dp - D), (0, Lp - L)))

    kernel = functools.partial(
        _mla_kernel, seq_len=S, seq_block=St, mask_seq=(Sp != S),
        bf16_eup=_bf16_transcendentals_ok())

    grid_spec = pltpu.PrefetchScalarGridSpec(
        num_scalar_prefetch=0,
        grid=(nl, nb, ns),            # label tiles outermost: each A tile is
        in_specs=[                    # fetched exactly once.
            pl.BlockSpec((Bt, St, Dp), lambda l, b, s: (b, s, 0)),   # x chunk
            # TODO(synk): pipeline_mode=pl.Buffered(1) on A would reclaim its
            # unused second VMEM buffer (its block index is constant in b, s).
            pl.BlockSpec((Dp, Lt), lambda l, b, s: (0, l)),          # A tile
        ],
        out_specs=pl.BlockSpec((Bt, Lt, Dp), lambda l, b, s: (b, l, 0)),
        scratch_shapes=[pltpu.VMEM((Bt, Lt, Dp), jnp.float32),   # numerator
                        pltpu.VMEM((Bt, Lt), jnp.float32)],      # denominator
    )

    cost = pl.CostEstimate(
        flops=int(4 * B * Sp * Dp * Lp),                  # two MXU matmuls
        transcendentals=int(2 * B * Sp * Lp),             # tanh + exp
        bytes_accessed=int(nl * B * Sp * Dp * 2           # x re-streamed per l-tile
                           + Dp * Lp * 2                  # A read once
                           + B * Lp * Dp * out_itemsize)) # output write

    out = pl.pallas_call(
        kernel,
        out_shape=jax.ShapeDtypeStruct((B, Lp, Dp), out_dtype),
        grid_spec=grid_spec,
        compiler_params=pltpu.CompilerParams(
            dimension_semantics=("parallel", "parallel", "arbitrary"),
            vmem_limit_bytes=vmem_limit),
        cost_estimate=cost,
    )(x_c, a_c)

    if Lp != L or Dp != D:
        out = out[:, :L, :D]          # drop padded label rows (garbage values)
    return out


def _reference(x, A):
    scores = jnp.tanh(jnp.einsum("bsd,dl->bsl", x, A))
    w = jax.nn.softmax(scores, axis=1)
    return jnp.einsum("bsl,bsd->bld", w, x)


if __name__ == "__main__":
    key = jax.random.PRNGKey(0)
    k_x, k_a = jax.random.split(key)

    # Small but representative shapes: D is a multiple of 128 (exercises the
    # new no-D-padding main path and the separate-denominator finalize),
    # S = 40 with seq_block=16 gives 3 chunks with a masked padded tail,
    # L = 200 / label_block=128 gives two label tiles (outermost grid axis),
    # and batch_block=2 gives two batch tiles.
    B, S, D, L = 4, 40, 128, 200

    x = jax.random.normal(k_x, (B, S, D), dtype=jnp.float32)
    # torch.nn.init.uniform_(A, -0.1, 0.1)
    A = jax.random.uniform(k_a, (D, L), dtype=jnp.float32,
                           minval=-0.1, maxval=0.1)

    out = multi_label_attention(x, A, batch_block=2, seq_block=16,
                                label_block=128)
    out = jax.block_until_ready(out)

    ref = _reference(x, A)
    assert out.shape == (B, L, D), out.shape
    # bf16 MXU operands / bf16 softmax weights -> loosened tolerance vs f32 ref.
    assert jnp.allclose(out, ref, atol=2e-2, rtol=2e-2), (
        float(jnp.max(jnp.abs(out - ref))))

    print("KERNEL_OK")
</pallas_src>

<mosaic_0001>
module attributes {stable_mosaic.version = 11 : i64} {
  func.func @_mla_kernel(%arg0: i32, %arg1: i32, %arg2: i32, %arg3: memref<2x16x128xbf16, #tpu.memory_space<vmem>>, %arg4: memref<128x128xbf16, #tpu.memory_space<vmem>>, %arg5: memref<2x128x128xf32, #tpu.memory_space<vmem>>, %arg6: memref<2x128x128xf32, #tpu.memory_space<vmem>>, %arg7: memref<2x128xf32, #tpu.memory_space<vmem>>) attributes {dimension_semantics = [#tpu.dimension_semantics<parallel>, #tpu.dimension_semantics<parallel>, #tpu.dimension_semantics<arbitrary>], iteration_bounds = array<i64: 2, 2, 3>, scalar_prefetch = 0 : i64, scratch_operands = 2 : i64, tpu.core_type = #tpu.core_type<tc>, window_params = [{transform_indices = @transform_0, window_bounds = array<i64: 2, 16, 128>}, {transform_indices = @transform_1, window_bounds = array<i64: 128, 128>}, {transform_indices = @transform_2, window_bounds = array<i64: 2, 128, 128>}]} {
    %c0_i32 = arith.constant 0 : i32
    %0 = arith.cmpi eq, %arg2, %c0_i32 : i32
    %1 = arith.extui %0 : i1 to i32
    %c0_i32_0 = arith.constant 0 : i32
    %2 = arith.cmpi ne, %1, %c0_i32_0 : i32
    scf.if %2 {
      %cst_19 = arith.constant 0.000000e+00 : f32
      %33 = vector.broadcast %cst_19 : f32 to vector<2x128x128xf32>
      %c0_20 = arith.constant 0 : index
      %c0_21 = arith.constant 0 : index
      %c0_22 = arith.constant 0 : index
      %34 = vector.load %arg6[%c0_20, %c0_21, %c0_22] : memref<2x128x128xf32, #tpu.memory_space<vmem>>, vector<2x128x128xf32>
      tpu.vector_store %arg6[%c0_20, %c0_21, %c0_22], %33 {strides = array<i32>} : memref<2x128x128xf32, #tpu.memory_space<vmem>>, vector<2x128x128xf32>,
      %cst_23 = arith.constant 0.000000e+00 : f32
      %35 = vector.broadcast %cst_23 : f32 to vector<2x128xf32>
      %c0_24 = arith.constant 0 : index
      %c0_25 = arith.constant 0 : index
      %36 = vector.load %arg7[%c0_24, %c0_25] : memref<2x128xf32, #tpu.memory_space<vmem>>, vector<2x128xf32>
      tpu.vector_store %arg7[%c0_24, %c0_25], %35 {strides = array<i32>} : memref<2x128xf32, #tpu.memory_space<vmem>>, vector<2x128xf32>,
    } else {
    }
    %c0 = arith.constant 0 : index
    %c0_1 = arith.constant 0 : index
    %c0_2 = arith.constant 0 : index
    %3 = vector.load %arg3[%c0, %c0_1, %c0_2] : memref<2x16x128xbf16, #tpu.memory_space<vmem>>, vector<2x16x128xbf16>
    %4 = vector.shape_cast %3 : vector<2x16x128xbf16> to vector<32x128xbf16>
    %c0_3 = arith.constant 0 : index
    %c0_4 = arith.constant 0 : index
    %5 = vector.load %arg4[%c0_3, %c0_4] : memref<128x128xbf16, #tpu.memory_space<vmem>>, vector<128x128xbf16>
    %cst = arith.constant dense<0.000000e+00> : vector<32x128xf32>
    %6 = tpu.matmul %4, %5, %cst {dimension_numbers = #tpu.dot_dimension_numbers<[1], [0], [0], [1], [0, 0, 1, 1], [], []>} : vector<32x128xbf16>, vector<128x128xbf16>, vector<32x128xf32> -> vector<32x128xf32>
    %7 = math.tanh %6 : vector<32x128xf32>
    %8 = math.exp %7 : vector<32x128xf32>
    %9 = arith.truncf %8 : vector<32x128xf32> to vector<32x128xbf16>
    %10 = vector.shape_cast %9 : vector<32x128xbf16> to vector<2x16x128xbf16>
    %11 = tpu.iota {dimensions = array<i32: 0>} : vector<16x128xi32>
    %c16_i32 = arith.constant 16 : i32
    %12 = arith.muli %arg2, %c16_i32 : i32
    %c40_i32 = arith.constant 40 : i32
    %13 = arith.subi %c40_i32, %12 : i32
    %14 = vector.broadcast %13 : i32 to vector<16x128xi32>
    %15 = arith.cmpi slt, %11, %14 : vector<16x128xi32>
    %16 = vector.shape_cast %15 : vector<16x128xi1> to vector<1x16x128xi1>
    %cst_5 = arith.constant 0.000000e+00 : bf16
    %17 = vector.broadcast %cst_5 : bf16 to vector<2x16x128xbf16>
    %18 = vector.shape_cast %16 : vector<1x16x128xi1> to vector<1x16x128xi1>
    %19 = vector.broadcast %18 : vector<1x16x128xi1> to vector<2x16x128xi1>
    %20 = arith.select %19, %10, %17 : vector<2x16x128xi1>, vector<2x16x128xbf16>
    %c0_6 = arith.constant 0 : index
    %c0_7 = arith.constant 0 : index
    %21 = vector.load %arg7[%c0_6, %c0_7] : memref<2x128xf32, #tpu.memory_space<vmem>>, vector<2x128xf32>
    %22 = arith.extf %20 : vector<2x16x128xbf16> to vector<2x16x128xf32>
    %cst_8 = arith.constant dense<0.000000e+00> : vector<2x128xf32>
    %23 = vector.multi_reduction <add>, %22, %cst_8 [1] : vector<2x16x128xf32> to vector<2x128xf32>
    %24 = arith.addf %21, %23 : vector<2x128xf32>
    %c0_9 = arith.constant 0 : index
    %c0_10 = arith.constant 0 : index
    %25 = vector.load %arg7[%c0_9, %c0_10] : memref<2x128xf32, #tpu.memory_space<vmem>>, vector<2x128xf32>
    tpu.vector_store %arg7[%c0_9, %c0_10], %24 {strides = array<i32>} : memref<2x128xf32, #tpu.memory_space<vmem>>, vector<2x128xf32>,
    %c0_11 = arith.constant 0 : index
    %c0_12 = arith.constant 0 : index
    %c0_13 = arith.constant 0 : index
    %26 = vector.load %arg6[%c0_11, %c0_12, %c0_13] : memref<2x128x128xf32, #tpu.memory_space<vmem>>, vector<2x128x128xf32>
    "tpu.trace_start"() <{level = 10 : i32, message = "bsl,bsd->bld"}> : () -> ()
    %cst_14 = arith.constant dense<0.000000e+00> : vector<2x128x128xf32>
    %27 = tpu.matmul %20, %3, %cst_14 {dimension_numbers = #tpu.dot_dimension_numbers<[1], [1], [2], [2], [0, 0, 0, 2, 1, 2], [0], [0]>} : vector<2x16x128xbf16>, vector<2x16x128xbf16>, vector<2x128x128xf32> -> vector<2x128x128xf32>
    "tpu.trace_stop"() : () -> ()
    %28 = arith.addf %26, %27 : vector<2x128x128xf32>
    %c0_15 = arith.constant 0 : index
    %c0_16 = arith.constant 0 : index
    %c0_17 = arith.constant 0 : index
    %29 = vector.load %arg6[%c0_15, %c0_16, %c0_17] : memref<2x128x128xf32, #tpu.memory_space<vmem>>, vector<2x128x128xf32>
    tpu.vector_store %arg6[%c0_15, %c0_16, %c0_17], %28 {strides = array<i32>} : memref<2x128x128xf32, #tpu.memory_space<vmem>>, vector<2x128x128xf32>,
    %c2_i32 = arith.constant 2 : i32
    %30 = arith.cmpi eq, %arg2, %c2_i32 : i32
    %31 = arith.extui %30 : i1 to i32
    %c0_i32_18 = arith.constant 0 : i32
    %32 = arith.cmpi ne, %31, %c0_i32_18 : i32
    scf.if %32 {
      %c0_19 = arith.constant 0 : index
      %c0_20 = arith.constant 0 : index
      %33 = vector.load %arg7[%c0_19, %c0_20] : memref<2x128xf32, #tpu.memory_space<vmem>>, vector<2x128xf32>
      %cst_21 = arith.constant 1.000000e+00 : f32
      %34 = vector.broadcast %cst_21 : f32 to vector<2x128xf32>
      %35 = arith.divf %34, %33 : vector<2x128xf32>
      %36 = vector.shape_cast %35 : vector<2x128xf32> to vector<2x128x1xf32>
      %37 = vector.broadcast %36 : vector<2x128x1xf32> to vector<2x128x128xf32>
      %c0_22 = arith.constant 0 : index
      %c0_23 = arith.constant 0 : index
      %c0_24 = arith.constant 0 : index
      %38 = vector.load %arg6[%c0_22, %c0_23, %c0_24] : memref<2x128x128xf32, #tpu.memory_space<vmem>>, vector<2x128x128xf32>
      %39 = arith.mulf %38, %37 : vector<2x128x128xf32>
      %c0_25 = arith.constant 0 : index
      %c0_26 = arith.constant 0 : index
      %c0_27 = arith.constant 0 : index
      %40 = vector.load %arg5[%c0_25, %c0_26, %c0_27] : memref<2x128x128xf32, #tpu.memory_space<vmem>>, vector<2x128x128xf32>
      tpu.vector_store %arg5[%c0_25, %c0_26, %c0_27], %39 {strides = array<i32>} : memref<2x128x128xf32, #tpu.memory_space<vmem>>, vector<2x128x128xf32>,
    } else {
    }
    return
  }
  func.func @transform_0(%arg0: i32, %arg1: i32, %arg2: i32) -> (i32, i32, i32) {
    %c0_i32 = arith.constant 0 : i32
    %c0_i32_0 = arith.constant 0 : i32
    return %arg1, %arg2, %c0_i32 : i32, i32, i32
  }
  func.func @transform_1(%arg0: i32, %arg1: i32, %arg2: i32) -> (i32, i32) {
    %c0_i32 = arith.constant 0 : i32
    %c0_i32_0 = arith.constant 0 : i32
    return %c0_i32, %arg0 : i32, i32
  }
  func.func @transform_2(%arg0: i32, %arg1: i32, %arg2: i32) -> (i32, i32, i32) {
    %c0_i32 = arith.constant 0 : i32
    %c0_i32_0 = arith.constant 0 : i32
    return %arg1, %arg0, %c0_i32 : i32, i32, i32
  }
}

</mosaic_0001>

<llo_original>
// kernel: tpu_custom_call.1
$region0: #{tpu_custom_call.1}
  #allocation0 [shape = 'u32[]', space=smem, size = 0x4, offset = 0x4, fixed_abs, tag = 'smem constant byte address 0x4 - core index']
  #allocation1 [shape = 'u32[72,128]{1,0:T(1,128)}', space=vmem, size = 0x9000, scoped, tag = 'internal scratch']
  #allocation2 [shape = 'f32[2,128,128]{2,1,0:T(8,128)}', space=vmem, size = 0x20000, scoped, tag = 'scratch operand']
  #allocation3 [shape = 'f32[2,128]{1,0:T(2,128)}', space=vmem, size = 0x400, scoped, tag = 'scratch operand']
  #allocation10 [shape = 's32[]', space=sflag, size = 0x4, offset = 0, fixed_abs, tag = 'sflag constant byte address 0x0 - dummy sync flag']
  #allocation12 [shape = 's32[]', space=sflag, size = 0x4, offset = 0, fixed_abs, tag = 'sflag constant byte address 0x0 - dummy sync flag']
  %s0 = inlined_call_operand.hbm [shape: bf16[4,48,128], index: 0, kind: input, shape index: {}]
  %s1 = inlined_call_operand.hbm [shape: bf16[128,256], index: 1, kind: input, shape index: {}]
  %s2 = inlined_call_operand.hbm [shape: f32[4,256,128], index: 2, kind: output, shape index: {}]
  %s3 = sld [smem:[#allocation0]]
  $region57: #{tpu_custom_call.1} parent=0
    _
  %s5 = ssub.s32 1, %s3
  %s6 = scalar_select 0, %s5, %s3
  $region1: #{tpu_custom_call.1} parent=0
    #allocation4 [shape = 'u8[16384]{0}', space=vmem, size = 0x4000, scoped, tag = 'input window, operand 0']
    #allocation5 [shape = 's32[2]{0}', space=sflag, size = 0x8, scoped, tag = 'scoped memory for tpu_custom_call.1']
    #allocation6 [shape = 's32[2]{0}', space=sflag, size = 0x8, scoped, tag = 'scoped memory for tpu_custom_call.1']
    #allocation7 [shape = 'u8[65536]{0}', space=vmem, size = 0x10000, scoped, tag = 'input window, operand 1']
    #allocation8 [shape = 's32[2]{0}', space=sflag, size = 0x8, scoped, tag = 'scoped memory for tpu_custom_call.1']
    #allocation9 [shape = 'u8[262144]{0}', space=vmem, size = 0x40000, scoped, tag = 'output window, operand 0']
    %7 = vsyncpa [#allocation5], 0
    %s8 = scalar_lea.sflag [#allocation5], 1
    %9 = vsyncpa %s8, 0
    %10 = vsyncpa [#allocation8], 0
    %s11 = scalar_lea.sflag [#allocation8], 1
    %12 = vsyncpa %s11, 0
    %13 = vsyncpa [#allocation6], 0
    %s14 = scalar_lea.sflag [#allocation6], 1
    %15 = vsyncpa %s14, 0
    loop: start=0, step=1, limit=14
    $region2: #{tpu_custom_call.1} parent=1 // loop_pre_header
      _
    $region3: #{tpu_custom_call.1} parent=1 // loop_header
      %s17 = sphi 0, %s21
      %p18 = scmp.ge.s32.totalorder %s17, 14
      %s24 = sphi 0, %s43
      %s25 = sphi 0, %s39
      %s26 = sphi 0, %s35
      %s27 = sphi 0, %s24
      %s28 = sphi 0, %s25
      %s29 = sphi 0, %s26
      %s30 = sphi 0, %s27
      %s31 = sphi 0, %s28
      %s32 = sphi 0, %s29
      %s48 = sphi 0, %s50
      %s51 = sphi 0, %s48
      %s52 = sphi 0, %s51
      %s68 = sphi 0, %s52
      %s74 = sphi 0, %s76
      %s77 = sphi 0, %s74
      %s78 = sphi 0, %s77
      %s94 = sphi 0, %s78
      %s102 = sphi 0, %s104
      %s105 = sphi 0, %s102
      %s106 = sphi 0, %s105
      %s122 = sphi 0, %s106
    $region4: #{tpu_custom_call.1} parent=1 // loop_header_branch
      %20 = sbr.rel (%p18) target = $region8
    $region5: #{tpu_custom_call.1} parent=1 // loop_body
      %s22 = ssub.s32 %s17, 1
      %s23 = ssub.s32 %s17, 2
      %s33 = sadd.s32 1, %s26
      %p34 = scmp.ge.s32.totalorder %s33, 3
      %s35 = scalar_select %p34, 0, %s33
      %s36 = sadd.s32 1, %s25
      %s37 = scalar_select %p34, %s36, %s25
      %p38 = scmp.ge.s32.totalorder %s37, 2
      %s39 = scalar_select %p38, 0, %s37
      %s40 = sadd.s32 1, %s24
      %s41 = scalar_select %p38, %s40, %s24
      %p42 = scmp.ge.s32.totalorder %s41, 2
      %s43 = scalar_select %p42, 0, %s41
      %s44 = ssub.s32 %s25, %s39
      %s45 = ssub.s32 %s26, %s35
      %s46 = sor.u32 %s44, %s45
      %p47 = scmp.eq.s32.totalorder %s46, 0
      %s49 = sadd.s32 %s48, 1
      %s50 = scalar_select %p47, %s48, %s49
      %p53 = pneg %p47
      %p54 = scmp.eq.s32.totalorder %s17, 11
      %p55 = por %p53, %p54
      %p56 = scmp.ne.s32.totalorder %s48, %s51
      %p57 = scmp.eq.s32.totalorder %s17, 0
      %p58 = por %p56, %p57
      %p59 = scmp.ne.s32.totalorder %s48, %s51
      %p60 = scmp.eq.s32.totalorder %s22, 11
      %p61 = por %p59, %p60
      %p62 = scmp.ne.s32.totalorder %s51, %s52
      %p63 = scmp.eq.s32.totalorder %s22, 0
      %p64 = por %p62, %p63
      %p65 = scmp.ne.s32.totalorder %s51, %s52
      %p66 = scmp.eq.s32.totalorder %s23, 11
      %p67 = por %p65, %p66
      %p69 = scmp.ne.s32.totalorder %s52, %s68
      %p70 = scmp.eq.s32.totalorder %s23, 0
      %p71 = por %p69, %p70
      %s72 = ssub.s32 %s24, %s43
      %p73 = scmp.eq.s32.totalorder %s72, 0
      %s75 = sadd.s32 %s74, 1
      %s76 = scalar_select %p73, %s74, %s75
      %p79 = pneg %p73
      %p80 = scmp.eq.s32.totalorder %s17, 11
      %p81 = por %p79, %p80
      %p82 = scmp.ne.s32.totalorder %s74, %s77
      %p83 = scmp.eq.s32.totalorder %s17, 0
      %p84 = por %p82, %p83
      %p85 = scmp.ne.s32.totalorder %s74, %s77
      %p86 = scmp.eq.s32.totalorder %s22, 11
      %p87 = por %p85, %p86
      %p88 = scmp.ne.s32.totalorder %s77, %s78
      %p89 = scmp.eq.s32.totalorder %s22, 0
      %p90 = por %p88, %p89
      %p91 = scmp.ne.s32.totalorder %s77, %s78
      %p92 = scmp.eq.s32.totalorder %s23, 11
      %p93 = por %p91, %p92
      %p95 = scmp.ne.s32.totalorder %s78, %s94
      %p96 = scmp.eq.s32.totalorder %s23, 0
      %p97 = por %p95, %p96
      %s98 = ssub.s32 %s25, %s39
      %s99 = ssub.s32 %s24, %s43
      %s100 = sor.u32 %s98, %s99
      %p101 = scmp.eq.s32.totalorder %s100, 0
      %s103 = sadd.s32 %s102, 1
      %s104 = scalar_select %p101, %s102, %s103
      %p107 = pneg %p101
      %p108 = scmp.eq.s32.totalorder %s17, 11
      %p109 = por %p107, %p108
      %p110 = scmp.ne.s32.totalorder %s102, %s105
      %p111 = scmp.eq.s32.totalorder %s17, 0
      %p112 = por %p110, %p111
      %p113 = scmp.ne.s32.totalorder %s102, %s105
      %p114 = scmp.eq.s32.totalorder %s22, 11
      %p115 = por %p113, %p114
      %p116 = scmp.ne.s32.totalorder %s105, %s106
      %p117 = scmp.eq.s32.totalorder %s22, 0
      %p118 = por %p116, %p117
      %p119 = scmp.ne.s32.totalorder %s105, %s106
      %p120 = scmp.eq.s32.totalorder %s23, 11
      %p121 = por %p119, %p120
      %p123 = scmp.ne.s32.totalorder %s106, %s122
      %p124 = scmp.eq.s32.totalorder %s23, 0
      %p125 = por %p123, %p124
      %p126 = scmp.le.s32.totalorder 1, %s17
      %p127 = scmp.lt.s32.totalorder %s17, 13
      %p128 = pnand %p126, %p127
      %p129 = pneg %p128
      // Predicated region
      $region9: #{tpu_custom_call.1} parent=5 // pred_check
        _
      $region10: #{tpu_custom_call.1} parent=5 // pred_check_branch
        %131 = sbr.rel (%p128) target = $region12
      $region11: #{tpu_custom_call.1} parent=5 // pred_region
        %s132 = ssub.s32 %s17, 1
      $region12: #{tpu_custom_call.1} parent=5 // pred_fallthru
        _
      %p133 = scmp.lt.s32.totalorder %s17, 12
      // Predicated region
      $region13: #{tpu_custom_call.1} parent=5 // pred_check
        %p134 = pneg %p133
      $region14: #{tpu_custom_call.1} parent=5 // pred_check_branch
        %136 = sbr.rel (%p134) target = $region16
      $region15: #{tpu_custom_call.1} parent=5 // pred_region
        // Predicated region
        $region17: #{tpu_custom_call.1} parent=15 // pred_check
          %p137 = pneg %p58
        $region18: #{tpu_custom_call.1} parent=15 // pred_check_branch
          %139 = sbr.rel (%p137) target = $region20
        $region19: #{tpu_custom_call.1} parent=15 // pred_region
          #allocation11 [shape = 'u32[6]{0}', space=smem, size = 0x18, scoped, tag = 'DMA stride descriptor']
          %s140 = sand.u32 %s48, 1
          %s141 = scalar_lea.sflag [#allocation5], %s140
          %s142 = sand.u32 %s48, 1
          %s143 = smul.addr %s142, 16
          %s144 = scalar_lea.vmem [#allocation4], %s143
          %s145 = smul.u32 2, %s25
          %s146 = smul.u32 2, %s26
          %148 = vsyncadd %s141, 0
          %s149 = smul.addr %s145, 6
          %s150 = sadd.s32 %s146, %s149
          %s151 = smul.addr %s150, 4
          %s152 = scalar_lea.hbm %s0, %s151
          %s154 = sshll.u32 1, 14
          %s155 = sxor.u32 4294967295, %s154
          %s157 = sld [smem:[#allocation0]]
          %s158 = sadd.s32 2, %s157
          %s160 = sshll.u32 7, 26
          %s161 = sxor.u32 4294967295, %s160
          %s162 = sand.u32 0, %s161
          %s163 = sshll.u32 %s158, 26
          %s164 = sor.u32 %s162, %s163
          %s165 = sshll.u32 %s152, 4
          %s166 = int_to_ptr.hbm [resolvable:$true] %s165
          %s167 = sshll.u32 %s144, 4
          %s168 = int_to_ptr.vmem [resolvable:$true] %s167
          %174 = sst [smem:[#allocation11]] 384
          %s175 = scalar_lea.smem [#allocation11], 1
          %176 = sst [smem:[%s175]] 128
          %s177 = scalar_lea.smem [#allocation11], 2
          %178 = sst [smem:[%s177]] 2
          %s179 = scalar_lea.smem [#allocation11], 3
          %180 = sst [smem:[%s179]] 64
          %s181 = scalar_lea.smem [#allocation11], 4
          %182 = sst [smem:[%s181]] 64
          %s183 = scalar_lea.smem [#allocation11], 5
          %184 = sst [smem:[%s183]] 4
          %186 = dma.general %s166, 256, %s168, %s141, [#allocation10], [#allocation11], %s164, 0
        $region20: #{tpu_custom_call.1} parent=15 // pred_fallthru
          _
        // Predicated region
        $region21: #{tpu_custom_call.1} parent=15 // pred_check
          %p187 = pneg %p84
        $region22: #{tpu_custom_call.1} parent=15 // pred_check_branch
          %189 = sbr.rel (%p187) target = $region24
        $region23: #{tpu_custom_call.1} parent=15 // pred_region
          %s190 = sand.u32 %s74, 1
          %s191 = scalar_lea.sflag [#allocation8], %s190
          %s192 = sand.u32 %s74, 1
          %s193 = smul.addr %s192, 64
          %s194 = scalar_lea.vmem [#allocation7], %s193
          %196 = vsyncadd %s191, 0
          %s197 = smul.addr %s24, 4
          %s198 = scalar_lea.hbm %s1, %s197
          %s199 = sshll.u32 %s198, 4
          %s200 = int_to_ptr.hbm [resolvable:$true] %s199
          %s201 = sshll.u32 %s194, 4
          %s202 = int_to_ptr.vmem [resolvable:$true] %s201
          %207 = dma.hbm_to_vmem [thread:$0]  %s200, 1024, %s202, %s191, 128, 64, 4
        $region24: #{tpu_custom_call.1} parent=15 // pred_fallthru
          _
      $region16: #{tpu_custom_call.1} parent=5 // pred_fallthru
        _
      %p208 = scmp.le.s32.totalorder 1, %s17
      %p209 = scmp.lt.s32.totalorder %s17, 13
      %p210 = pnand %p208, %p209
      %p211 = pneg %p210
      // Predicated region
      $region25: #{tpu_custom_call.1} parent=5 // pred_check
        _
      $region26: #{tpu_custom_call.1} parent=5 // pred_check_branch
        %213 = sbr.rel (%p210) target = $region28
      $region27: #{tpu_custom_call.1} parent=5 // pred_region
        %s214 = ssub.s32 %s17, 1
        %s215 = sand.u32 %s51, 1
        %s216 = scalar_lea.sflag [#allocation5], %s215
        %s217 = sand.u32 %s51, 1
        %s218 = smul.addr %s217, 16
        %s219 = scalar_lea.vmem [#allocation4], %s218
        // Predicated region
        $region29: #{tpu_custom_call.1} parent=27 // pred_check
          %p220 = pneg %p64
        $region30: #{tpu_custom_call.1} parent=27 // pred_check_branch
          %222 = sbr.rel (%p220) target = $region32
        $region31: #{tpu_custom_call.1} parent=27 // pred_region
          %224 = dma.done %s216, 256
        $region32: #{tpu_custom_call.1} parent=27 // pred_fallthru
          _
        %s225 = sand.u32 %s77, 1
        %s226 = scalar_lea.sflag [#allocation8], %s225
        %s227 = sand.u32 %s77, 1
        %s228 = smul.addr %s227, 64
        %s229 = scalar_lea.vmem [#allocation7], %s228
        // Predicated region
        $region33: #{tpu_custom_call.1} parent=27 // pred_check
          %p230 = pneg %p90
        $region34: #{tpu_custom_call.1} parent=27 // pred_check_branch
          %232 = sbr.rel (%p230) target = $region36
        $region35: #{tpu_custom_call.1} parent=27 // pred_region
          %234 = dma.done %s226, 1024
        $region36: #{tpu_custom_call.1} parent=27 // pred_fallthru
          _
        %s235 = sand.u32 %s51, 1
        %s236 = scalar_lea.sflag [#allocation5], %s235
        %s237 = sand.u32 %s51, 1
        %s238 = smul.addr %s237, 16
        %s239 = scalar_lea.vmem [#allocation4], %s238
        %p240 = pneg %p64
        %p241 = pneg %p61
        %s242 = sand.u32 %s77, 1
        %s243 = scalar_lea.sflag [#allocation8], %s242
        %s244 = sand.u32 %s77, 1
        %s245 = smul.addr %s244, 64
        %s246 = scalar_lea.vmem [#allocation7], %s245
        %p247 = pneg %p90
        %p248 = pneg %p87
        %p249 = pneg %p118
        %p250 = pneg %p115
        %s251 = sand.u32 %s105, 1
        %s252 = scalar_lea.sflag [#allocation6], %s251
        %s253 = sand.u32 %s105, 1
        %s254 = smul.addr %s253, 256
        %s255 = scalar_lea.vmem [#allocation9], %s254
        %s256 = smul.u32 2, %s28
        %s257 = smul.u32 2, %s29
        %s258 = smul.u32 2, %s28
        %s259 = smul.u32 16, %s27
        %p261 = scmp.eq.s32.totalorder %s29, 0
        // Predicated region
        $region37: #{tpu_custom_call.1} parent=27 // pred_check
          %p262 = pneg %p261
        $region38: #{tpu_custom_call.1} parent=27 // pred_check_branch
          %264 = sbr.rel (%p262) target = $region40
        $region39: #{tpu_custom_call.1} parent=27 // pred_region
          %265 = vst [vmem:[#allocation2] sm:$0xff] 0.0
          %266 = vst [vmem:[#allocation2 + $0x8] sm:$0xff] 0.0
          %267 = vst [vmem:[#allocation2 + $0x10] sm:$0xff] 0.0
          %268 = vst [vmem:[#allocation2 + $0x18] sm:$0xff] 0.0
          %269 = vst [vmem:[#allocation2 + $0x20] sm:$0xff] 0.0
          %270 = vst [vmem:[#allocation2 + $0x28] sm:$0xff] 0.0
          %271 = vst [vmem:[#allocation2 + $0x30] sm:$0xff] 0.0
          %272 = vst [vmem:[#allocation2 + $0x38] sm:$0xff] 0.0
          %273 = vst [vmem:[#allocation2 + $0x40] sm:$0xff] 0.0
          %274 = vst [vmem:[#allocation2 + $0x48] sm:$0xff] 0.0
          %275 = vst [vmem:[#allocation2 + $0x50] sm:$0xff] 0.0
          %276 = vst [vmem:[#allocation2 + $0x58] sm:$0xff] 0.0
          %277 = vst [vmem:[#allocation2 + $0x60] sm:$0xff] 0.0
          %278 = vst [vmem:[#allocation2 + $0x68] sm:$0xff] 0.0
          %279 = vst [vmem:[#allocation2 + $0x70] sm:$0xff] 0.0
          %280 = vst [vmem:[#allocation2 + $0x78] sm:$0xff] 0.0
          %281 = vst [vmem:[#allocation2 + $0x80] sm:$0xff] 0.0
          %282 = vst [vmem:[#allocation2 + $0x88] sm:$0xff] 0.0
          %283 = vst [vmem:[#allocation2 + $0x90] sm:$0xff] 0.0
          %284 = vst [vmem:[#allocation2 + $0x98] sm:$0xff] 0.0
          %285 = vst [vmem:[#allocation2 + $0xa0] sm:$0xff] 0.0
          %286 = vst [vmem:[#allocation2 + $0xa8] sm:$0xff] 0.0
          %287 = vst [vmem:[#allocation2 + $0xb0] sm:$0xff] 0.0
          %288 = vst [vmem:[#allocation2 + $0xb8] sm:$0xff] 0.0
          %289 = vst [vmem:[#allocation2 + $0xc0] sm:$0xff] 0.0
          %290 = vst [vmem:[#allocation2 + $0xc8] sm:$0xff] 0.0
          %291 = vst [vmem:[#allocation2 + $0xd0] sm:$0xff] 0.0
          %292 = vst [vmem:[#allocation2 + $0xd8] sm:$0xff] 0.0
          %293 = vst [vmem:[#allocation2 + $0xe0] sm:$0xff] 0.0
          %294 = vst [vmem:[#allocation2 + $0xe8] sm:$0xff] 0.0
          %295 = vst [vmem:[#allocation2 + $0xf0] sm:$0xff] 0.0
          %296 = vst [vmem:[#allocation2 + $0xf8] sm:$0xff] 0.0
          %297 = vst [vmem:[#allocation3] sm:$0x3] 0.0
        $region40: #{tpu_custom_call.1} parent=27 // pred_fallthru
          _
        %v298 = vld [vmem:[%s219] sm:$0xf]
        %v299 = vld [vmem:[%s219 + $0x4] sm:$0xf]
        %v300 = vld [vmem:[%s219 + $0x8] sm:$0xf]
        %v301 = vld [vmem:[%s219 + $0xc] sm:$0xf]
        %v302 = vld [vmem:[%s229] sm:$0xf]
        %v303 = vld [vmem:[%s229 + $0x4] sm:$0xf]
        %v304 = vld [vmem:[%s229 + $0x8] sm:$0xf]
        %v305 = vld [vmem:[%s229 + $0xc] sm:$0xf]
        %v306 = vld [vmem:[%s229 + $0x10] sm:$0xf]
        %v307 = vld [vmem:[%s229 + $0x14] sm:$0xf]
        %v308 = vld [vmem:[%s229 + $0x18] sm:$0xf]
        %v309 = vld [vmem:[%s229 + $0x1c] sm:$0xf]
        %v310 = vld [vmem:[%s229 + $0x20] sm:$0xf]
        %v311 = vld [vmem:[%s229 + $0x24] sm:$0xf]
        %v312 = vld [vmem:[%s229 + $0x28] sm:$0xf]
        %v313 = vld [vmem:[%s229 + $0x2c] sm:$0xf]
        %v314 = vld [vmem:[%s229 + $0x30] sm:$0xf]
        %v315 = vld [vmem:[%s229 + $0x34] sm:$0xf]
        %v316 = vld [vmem:[%s229 + $0x38] sm:$0xf]
        %v317 = vld [vmem:[%s229 + $0x3c] sm:$0xf]
        %v322 = vunpack.c.l.b16 %v298
        %v323 = vunpack.c.l.b16 %v299
        %v324 = vunpack.c.l.b16 %v300
        %v325 = vunpack.c.l.b16 %v301
        %v326 = vpack.c.b16 %v323, %v322
        %v327 = vpack.c.b16 %v325, %v324
        %v346 = vunpack.c.l.b16 %v302
        %v347 = vunpack.c.l.b16 %v303
        %v348 = vunpack.c.l.b16 %v304
        %v349 = vunpack.c.l.b16 %v305
        %v350 = vunpack.c.l.b16 %v306
        %v351 = vunpack.c.l.b16 %v307
        %v352 = vunpack.c.l.b16 %v308
        %v353 = vunpack.c.l.b16 %v309
        %v354 = vunpack.c.l.b16 %v310
        %v355 = vunpack.c.l.b16 %v311
        %v356 = vunpack.c.l.b16 %v312
        %v357 = vunpack.c.l.b16 %v313
        %v358 = vunpack.c.l.b16 %v314
        %v359 = vunpack.c.l.b16 %v315
        %v360 = vunpack.c.l.b16 %v316
        %v361 = vunpack.c.l.b16 %v317
        %v362 = vpack.c.b16 %v347, %v346
        %v363 = vpack.c.b16 %v349, %v348
        %v364 = vpack.c.b16 %v351, %v350
        %v365 = vpack.c.b16 %v353, %v352
        %v366 = vpack.c.b16 %v355, %v354
        %v367 = vpack.c.b16 %v357, %v356
        %v368 = vpack.c.b16 %v359, %v358
        %v369 = vpack.c.b16 %v361, %v360
        %378 = vmatpush.bf16.msra.mxu0 %v369
        %379 = vmatpush.bf16.msra.mxu0 %v368
        %380 = vmatpush.bf16.msra.mxu0 %v367
        %381 = vmatpush.bf16.msra.mxu0 %v366
        %382 = vmatpush.bf16.msra.mxu0 %v365
        %383 = vmatpush.bf16.msra.mxu0 %v364
        %384 = vmatpush.bf16.msra.mxu0 %v363
        %385 = vmatpush.bf16.msra.mxu0 %v362
        %386 = vmatmul.bf16.gmra.mxu0 %v326
        %v387 = vpop.f32.mrf.mxu0
        %v388 = vadd.f32 0.0, %v387
        %v389 = vpop.f32.mrf.mxu0
        %v390 = vadd.f32 0.0, %v389
        %391 = vmatmul.bf16.gmra.mxu0 %v327
        %v392 = vpop.f32.mrf.mxu0
        %v393 = vadd.f32 0.0, %v392
        %v394 = vpop.f32.mrf.mxu0
        %v395 = vadd.f32 0.0, %v394
        %396 = vdwg.mxu0
        %v397 = vtanh.pop %v388
        %v398 = vtanh.pop %v390
        %v399 = vtanh.pop %v393
        %v400 = vtanh.pop %v395
        %v401 = vmul.f32 %v397, 1.442695
        %v402 = vpow.pop %v401
        %v403 = vmul.f32 %v398, 1.442695
        %v404 = vpow.pop %v403
        %v405 = vmul.f32 %v399, 1.442695
        %v406 = vpow.pop %v405
        %v407 = vmul.f32 %v400, 1.442695
        %v408 = vpow.pop %v407
        %v409 = vpack.c.bf16 %v402, %v402
        %v410 = vpack.c.bf16 %v404, %v404
        %v411 = vpack.c.bf16 %v406, %v406
        %v412 = vpack.c.bf16 %v408, %v408
        %v413 = vlaneseq
        %v414 = vshrl.u32 %v413, 7
        %v415 = vadd.s32 %v414, 8
        %s416 = smul.u32 %s29, 16
        %s417 = ssub.s32 40, %s416
        %v418 = vstv %s417
        %vm419 = vcmp.lt.s32.totalorder %v414, %v418
        %vm420 = vcmp.lt.s32.totalorder %v415, %v418
        %v421 = vsel %vm419, 1, 0
        %v422 = vsel %vm420, 1, 0
        %vm423 = vcmp.eq.s32.totalorder %v421, 1
        %vm424 = vcmp.eq.s32.totalorder %v422, 1
        %vm425 = vmpackc.low %vm423, %vm423
        %vm426 = vmpackc.low %vm424, %vm424
        %v427 = vsel %vm425, %v409, 0
        %v428 = vsel %vm426, %v410, 0
        %v429 = vsel %vm425, %v411, 0
        %v430 = vsel %vm426, %v412, 0
        %v431 = vld [vmem:[#allocation3] sm:$0x3]
        %v432 = vunpack.c.l.bf16 %v427
        %v433 = vunpack.c.l.bf16 %v428
        %v434 = vunpack.c.l.bf16 %v429
        %v435 = vunpack.c.l.bf16 %v430
        %v436 = vadd.f32 %v432, %v433
        %v437 = vrot.slane %v436, 4
        %v438 = vadd.f32 %v436, %v437
        %v439 = vrot.slane %v438, 2
        %v440 = vadd.f32 %v438, %v439
        %v441 = vrot.slane %v440, 1
        %v442 = vadd.f32 %v440, %v441
        %v443 = vadd.f32 %v434, %v435
        %v444 = vrot.slane %v443, 4
        %v445 = vadd.f32 %v443, %v444
        %v446 = vrot.slane %v445, 2
        %v447 = vadd.f32 %v445, %v446
        %v448 = vrot.slane %v447, 1
        %v449 = vadd.f32 %v447, %v448
        %vm452 = vcmask 1041409
        %v453 = vsel %vm452, %v449, %v442
        %v455 = vadd.f32 %v431, %v453
        %456 = vst [vmem:[#allocation3] sm:$0x3] %v455
        %v457 = vld [vmem:[#allocation2] sm:$0xff]
        %v458 = vld [vmem:[#allocation2 + $0x8] sm:$0xff]
        %v459 = vld [vmem:[#allocation2 + $0x10] sm:$0xff]
        %v460 = vld [vmem:[#allocation2 + $0x18] sm:$0xff]
        %v461 = vld [vmem:[#allocation2 + $0x20] sm:$0xff]
        %v462 = vld [vmem:[#allocation2 + $0x28] sm:$0xff]
        %v463 = vld [vmem:[#allocation2 + $0x30] sm:$0xff]
        %v464 = vld [vmem:[#allocation2 + $0x38] sm:$0xff]
        %v465 = vld [vmem:[#allocation2 + $0x40] sm:$0xff]
        %v466 = vld [vmem:[#allocation2 + $0x48] sm:$0xff]
        %v467 = vld [vmem:[#allocation2 + $0x50] sm:$0xff]
        %v468 = vld [vmem:[#allocation2 + $0x58] sm:$0xff]
        %v469 = vld [vmem:[#allocation2 + $0x60] sm:$0xff]
        %v470 = vld [vmem:[#allocation2 + $0x68] sm:$0xff]
        %v471 = vld [vmem:[#allocation2 + $0x70] sm:$0xff]
        %v472 = vld [vmem:[#allocation2 + $0x78] sm:$0xff]
        %v473 = vld [vmem:[#allocation2 + $0x80] sm:$0xff]
        %v474 = vld [vmem:[#allocation2 + $0x88] sm:$0xff]
        %v475 = vld [vmem:[#allocation2 + $0x90] sm:$0xff]
        %v476 = vld [vmem:[#allocation2 + $0x98] sm:$0xff]
        %v477 = vld [vmem:[#allocation2 + $0xa0] sm:$0xff]
        %v478 = vld [vmem:[#allocation2 + $0xa8] sm:$0xff]
        %v479 = vld [vmem:[#allocation2 + $0xb0] sm:$0xff]
        %v480 = vld [vmem:[#allocation2 + $0xb8] sm:$0xff]
        %v481 = vld [vmem:[#allocation2 + $0xc0] sm:$0xff]
        %v482 = vld [vmem:[#allocation2 + $0xc8] sm:$0xff]
        %v483 = vld [vmem:[#allocation2 + $0xd0] sm:$0xff]
        %v484 = vld [vmem:[#allocation2 + $0xd8] sm:$0xff]
        %v485 = vld [vmem:[#allocation2 + $0xe0] sm:$0xff]
        %v486 = vld [vmem:[#allocation2 + $0xe8] sm:$0xff]
        %v487 = vld [vmem:[#allocation2 + $0xf0] sm:$0xff]
        %v488 = vld [vmem:[#allocation2 + $0xf8] sm:$0xff]
        %v491 = vunpack.c.l.b16 %v427
        %v492 = vunpack.c.l.b16 %v428
        %v493 = vpack.c.b16 %v492, %v491
        %495 = vxpose.xlu0.c.b16.start [1/8] %v493, 128
        %496 = vxpose.xlu0.c.b16.cont [2/8] 0, 128
        %497 = vxpose.xlu0.c.b16.cont [3/8] 0, 128
        %498 = vxpose.xlu0.c.b16.cont [4/8] 0, 128
        %499 = vxpose.xlu0.c.b16.cont [5/8] 0, 128
        %500 = vxpose.xlu0.c.b16.cont [6/8] 0, 128
        %501 = vxpose.xlu0.c.b16.cont [7/8] 0, 128
        %502 = vxpose.xlu0.c.b16.end [8/8] 0, 128
        %v503 = vpop.trf.xlu0
        %v504 = vpop.trf.xlu0
        %v505 = vpop.trf.xlu0
        %v506 = vpop.trf.xlu0
        %v507 = vpop.trf.xlu0
        %v508 = vpop.trf.xlu0
        %v509 = vpop.trf.xlu0
        %v510 = vpop.trf.xlu0
        %vm511 = vcmask 130048
        %v513 = vsel %vm511, %v503, 0
        %v516 = vsel %vm511, %v504, 0
        %v519 = vsel %vm511, %v505, 0
        %v522 = vsel %vm511, %v506, 0
        %v525 = vsel %vm511, %v507, 0
        %v528 = vsel %vm511, %v508, 0
        %v531 = vsel %vm511, %v509, 0
        %v534 = vsel %vm511, %v510, 0
        %536 = vmatpush.bf16.msra.mxu0 0
        %537 = vmatpush.bf16.msra.mxu0 0
        %538 = vmatpush.bf16.msra.mxu0 0
        %539 = vmatpush.bf16.msra.mxu0 0
        %540 = vmatpush.bf16.msra.mxu0 0
        %541 = vmatpush.bf16.msra.mxu0 0
        %542 = vmatpush.bf16.msra.mxu0 0
        %543 = vmatpush.bf16.msra.mxu0 %v326
        %544 = vmatmul.bf16.gmra.mxu0 %v513
        %v545 = vpop.f32.mrf.mxu0
        %v546 = vadd.f32 0.0, %v545
        %v547 = vpop.f32.mrf.mxu0
        %v548 = vadd.f32 0.0, %v547
        %549 = vmatmul.bf16.gmra.mxu0 %v516
        %v550 = vpop.f32.mrf.mxu0
        %v551 = vadd.f32 0.0, %v550
        %v552 = vpop.f32.mrf.mxu0
        %v553 = vadd.f32 0.0, %v552
        %554 = vmatmul.bf16.gmra.mxu0 %v519
        %v555 = vpop.f32.mrf.mxu0
        %v556 = vadd.f32 0.0, %v555
        %v557 = vpop.f32.mrf.mxu0
        %v558 = vadd.f32 0.0, %v557
        %559 = vmatmul.bf16.gmra.mxu0 %v522
        %v560 = vpop.f32.mrf.mxu0
        %v561 = vadd.f32 0.0, %v560
        %v562 = vpop.f32.mrf.mxu0
        %v563 = vadd.f32 0.0, %v562
        %564 = vmatmul.bf16.gmra.mxu0 %v525
        %v565 = vpop.f32.mrf.mxu0
        %v566 = vadd.f32 0.0, %v565
        %v567 = vpop.f32.mrf.mxu0
        %v568 = vadd.f32 0.0, %v567
        %569 = vmatmul.bf16.gmra.mxu0 %v528
        %v570 = vpop.f32.mrf.mxu0
        %v571 = vadd.f32 0.0, %v570
        %v572 = vpop.f32.mrf.mxu0
        %v573 = vadd.f32 0.0, %v572
        %574 = vmatmul.bf16.gmra.mxu0 %v531
        %v575 = vpop.f32.mrf.mxu0
        %v576 = vadd.f32 0.0, %v575
        %v577 = vpop.f32.mrf.mxu0
        %v578 = vadd.f32 0.0, %v577
        %579 = vmatmul.bf16.gmra.mxu0 %v534
        %v580 = vpop.f32.mrf.mxu0
        %v581 = vadd.f32 0.0, %v580
        %v582 = vpop.f32.mrf.mxu0
        %v583 = vadd.f32 0.0, %v582
        %584 = vdwg.mxu0
        %v587 = vunpack.c.l.b16 %v429
        %v588 = vunpack.c.l.b16 %v430
        %v589 = vpack.c.b16 %v588, %v587
        %591 = vxpose.xlu0.c.b16.start [1/8] %v589, 128
        %592 = vxpose.xlu0.c.b16.cont [2/8] 0, 128
        %593 = vxpose.xlu0.c.b16.cont [3/8] 0, 128
        %594 = vxpose.xlu0.c.b16.cont [4/8] 0, 128
        %595 = vxpose.xlu0.c.b16.cont [5/8] 0, 128
        %596 = vxpose.xlu0.c.b16.cont [6/8] 0, 128
        %597 = vxpose.xlu0.c.b16.cont [7/8] 0, 128
        %598 = vxpose.xlu0.c.b16.end [8/8] 0, 128
        %v599 = vpop.trf.xlu0
        %v600 = vpop.trf.xlu0
        %v601 = vpop.trf.xlu0
        %v602 = vpop.trf.xlu0
        %v603 = vpop.trf.xlu0
        %v604 = vpop.trf.xlu0
        %v605 = vpop.trf.xlu0
        %v606 = vpop.trf.xlu0
        %v608 = vsel %vm511, %v599, 0
        %v611 = vsel %vm511, %v600, 0
        %v614 = vsel %vm511, %v601, 0
        %v617 = vsel %vm511, %v602, 0
        %v620 = vsel %vm511, %v603, 0
        %v623 = vsel %vm511, %v604, 0
        %v626 = vsel %vm511, %v605, 0
        %v629 = vsel %vm511, %v606, 0
        %631 = vmatpush.bf16.msra.mxu0 0
        %632 = vmatpush.bf16.msra.mxu0 0
        %633 = vmatpush.bf16.msra.mxu0 0
        %634 = vmatpush.bf16.msra.mxu0 0
        %635 = vmatpush.bf16.msra.mxu0 0
        %636 = vmatpush.bf16.msra.mxu0 0
        %637 = vmatpush.bf16.msra.mxu0 0
        %638 = vmatpush.bf16.msra.mxu0 %v327
        %639 = vmatmul.bf16.gmra.mxu0 %v608
        %v640 = vpop.f32.mrf.mxu0
        %v641 = vadd.f32 0.0, %v640
        %v642 = vpop.f32.mrf.mxu0
        %v643 = vadd.f32 0.0, %v642
        %644 = vmatmul.bf16.gmra.mxu0 %v611
        %v645 = vpop.f32.mrf.mxu0
        %v646 = vadd.f32 0.0, %v645
        %v647 = vpop.f32.mrf.mxu0
        %v648 = vadd.f32 0.0, %v647
        %649 = vmatmul.bf16.gmra.mxu0 %v614
        %v650 = vpop.f32.mrf.mxu0
        %v651 = vadd.f32 0.0, %v650
        %v652 = vpop.f32.mrf.mxu0
        %v653 = vadd.f32 0.0, %v652
        %654 = vmatmul.bf16.gmra.mxu0 %v617
        %v655 = vpop.f32.mrf.mxu0
        %v656 = vadd.f32 0.0, %v655
        %v657 = vpop.f32.mrf.mxu0
        %v658 = vadd.f32 0.0, %v657
        %659 = vmatmul.bf16.gmra.mxu0 %v620
        %v660 = vpop.f32.mrf.mxu0
        %v661 = vadd.f32 0.0, %v660
        %v662 = vpop.f32.mrf.mxu0
        %v663 = vadd.f32 0.0, %v662
        %664 = vmatmul.bf16.gmra.mxu0 %v623
        %v665 = vpop.f32.mrf.mxu0
        %v666 = vadd.f32 0.0, %v665
        %v667 = vpop.f32.mrf.mxu0
        %v668 = vadd.f32 0.0, %v667
        %669 = vmatmul.bf16.gmra.mxu0 %v626
        %v670 = vpop.f32.mrf.mxu0
        %v671 = vadd.f32 0.0, %v670
        %v672 = vpop.f32.mrf.mxu0
        %v673 = vadd.f32 0.0, %v672
        %674 = vmatmul.bf16.gmra.mxu0 %v629
        %v675 = vpop.f32.mrf.mxu0
        %v676 = vadd.f32 0.0, %v675
        %v677 = vpop.f32.mrf.mxu0
        %v678 = vadd.f32 0.0, %v677
        %679 = vdwg.mxu0
        %v680 = vadd.f32 %v457, %v546
        %v681 = vadd.f32 %v458, %v548
        %v682 = vadd.f32 %v459, %v551
        %v683 = vadd.f32 %v460, %v553
        %v684 = vadd.f32 %v461, %v556
        %v685 = vadd.f32 %v462, %v558
        %v686 = vadd.f32 %v463, %v561
        %v687 = vadd.f32 %v464, %v563
        %v688 = vadd.f32 %v465, %v566
        %v689 = vadd.f32 %v466, %v568
        %v690 = vadd.f32 %v467, %v571
        %v691 = vadd.f32 %v468, %v573
        %v692 = vadd.f32 %v469, %v576
        %v693 = vadd.f32 %v470, %v578
        %v694 = vadd.f32 %v471, %v581
        %v695 = vadd.f32 %v472, %v583
        %v696 = vadd.f32 %v473, %v641
        %v697 = vadd.f32 %v474, %v643
        %v698 = vadd.f32 %v475, %v646
        %v699 = vadd.f32 %v476, %v648
        %v700 = vadd.f32 %v477, %v651
        %v701 = vadd.f32 %v478, %v653
        %v702 = vadd.f32 %v479, %v656
        %v703 = vadd.f32 %v480, %v658
        %v704 = vadd.f32 %v481, %v661
        %v705 = vadd.f32 %v482, %v663
        %v706 = vadd.f32 %v483, %v666
        %v707 = vadd.f32 %v484, %v668
        %v708 = vadd.f32 %v485, %v671
        %v709 = vadd.f32 %v486, %v673
        %v710 = vadd.f32 %v487, %v676
        %v711 = vadd.f32 %v488, %v678
        %712 = vst [vmem:[#allocation2] sm:$0xff] %v680
        %713 = vst [vmem:[#allocation2 + $0x8] sm:$0xff] %v681
        %714 = vst [vmem:[#allocation2 + $0x10] sm:$0xff] %v682
        %715 = vst [vmem:[#allocation2 + $0x18] sm:$0xff] %v683
        %716 = vst [vmem:[#allocation2 + $0x20] sm:$0xff] %v684
        %717 = vst [vmem:[#allocation2 + $0x28] sm:$0xff] %v685
        %718 = vst [vmem:[#allocation2 + $0x30] sm:$0xff] %v686
        %719 = vst [vmem:[#allocation2 + $0x38] sm:$0xff] %v687
        %720 = vst [vmem:[#allocation2 + $0x40] sm:$0xff] %v688
        %721 = vst [vmem:[#allocation2 + $0x48] sm:$0xff] %v689
        %722 = vst [vmem:[#allocation2 + $0x50] sm:$0xff] %v690
        %723 = vst [vmem:[#allocation2 + $0x58] sm:$0xff] %v691
        %724 = vst [vmem:[#allocation2 + $0x60] sm:$0xff] %v692
        %725 = vst [vmem:[#allocation2 + $0x68] sm:$0xff] %v693
        %726 = vst [vmem:[#allocation2 + $0x70] sm:$0xff] %v694
        %727 = vst [vmem:[#allocation2 + $0x78] sm:$0xff] %v695
        %728 = vst [vmem:[#allocation2 + $0x80] sm:$0xff] %v696
        %729 = vst [vmem:[#allocation2 + $0x88] sm:$0xff] %v697
        %730 = vst [vmem:[#allocation2 + $0x90] sm:$0xff] %v698
        %731 = vst [vmem:[#allocation2 + $0x98] sm:$0xff] %v699
        %732 = vst [vmem:[#allocation2 + $0xa0] sm:$0xff] %v700
        %733 = vst [vmem:[#allocation2 + $0xa8] sm:$0xff] %v701
        %734 = vst [vmem:[#allocation2 + $0xb0] sm:$0xff] %v702
        %735 = vst [vmem:[#allocation2 + $0xb8] sm:$0xff] %v703
        %736 = vst [vmem:[#allocation2 + $0xc0] sm:$0xff] %v704
        %737 = vst [vmem:[#allocation2 + $0xc8] sm:$0xff] %v705
        %738 = vst [vmem:[#allocation2 + $0xd0] sm:$0xff] %v706
        %739 = vst [vmem:[#allocation2 + $0xd8] sm:$0xff] %v707
        %740 = vst [vmem:[#allocation2 + $0xe0] sm:$0xff] %v708
        %741 = vst [vmem:[#allocation2 + $0xe8] sm:$0xff] %v709
        %742 = vst [vmem:[#allocation2 + $0xf0] sm:$0xff] %v710
        %743 = vst [vmem:[#allocation2 + $0xf8] sm:$0xff] %v711
        %p744 = scmp.eq.s32.totalorder %s29, 2
        // Predicated region
        $region41: #{tpu_custom_call.1} parent=27 // pred_check
          %p745 = pneg %p744
        $region42: #{tpu_custom_call.1} parent=27 // pred_check_branch
          %747 = sbr.rel (%p745) target = $region44
        $region43: #{tpu_custom_call.1} parent=27 // pred_region
          %v748 = vld [vmem:[#allocation3] sm:$0x3]
          %v749 = vrcp.pop %v748
          %v750 = vmul.f32 %v748, %v749
          %v751 = vsub.f32 1.0, %v750
          %v752 = vmul.f32 %v749, %v751
          %v753 = vadd.f32 %v749, %v752
          %vm754 = vweird.f32 %v748
          %vm755 = vweird.f32 %v749
          %vm756 = vmor %vm754, %vm755
          %v757 = vsel %vm756, %v749, %v753
          %v758 = vand.u32 2147483647, %v748
          %vm759 = vcmp.eq.f32.partialorder %v758, 8.507059e+37
          %v760 = vand.u32 %v748, 2147483648
          %v761 = vor.u32 1.1754944e-38, %v760
          %v762 = vsel %vm759, %v761, %v757
          %v763 = vmul.f32 1.0, %v762
          %v764 = vperm.slane %v763, 0
          %v765 = vlaneseq
          %v766 = vshrl.u32 %v765, 7
          %768 = vset.pattern.permute.xlu0 %v766
          %769 = vperm.xlu0 %768, %v764
          %v770 = vpop.permute.xlu0 %769
          %v771 = vlaneseq
          %v772 = vshrl.u32 %v771, 7
          %v773 = vadd.s32 %v772, 8
          %774 = vset.pattern.permute.xlu0 %v773
          %775 = vperm.xlu0 %774, %v764
          %v776 = vpop.permute.xlu0 %775
          %v777 = vlaneseq
          %v778 = vshrl.u32 %v777, 7
          %v779 = vadd.s32 %v778, 16
          %780 = vset.pattern.permute.xlu0 %v779
          %781 = vperm.xlu0 %780, %v764
          %v782 = vpop.permute.xlu0 %781
          %v783 = vlaneseq
          %v784 = vshrl.u32 %v783, 7
          %v785 = vadd.s32 %v784, 24
          %786 = vset.pattern.permute.xlu0 %v785
          %787 = vperm.xlu0 %786, %v764
          %v788 = vpop.permute.xlu0 %787
          %v789 = vlaneseq
          %v790 = vshrl.u32 %v789, 7
          %v791 = vadd.s32 %v790, 32
          %792 = vset.pattern.permute.xlu0 %v791
          %793 = vperm.xlu0 %792, %v764
          %v794 = vpop.permute.xlu0 %793
          %v795 = vlaneseq
          %v796 = vshrl.u32 %v795, 7
          %v797 = vadd.s32 %v796, 40
          %798 = vset.pattern.permute.xlu0 %v797
          %799 = vperm.xlu0 %798, %v764
          %v800 = vpop.permute.xlu0 %799
          %v801 = vlaneseq
          %v802 = vshrl.u32 %v801, 7
          %v803 = vadd.s32 %v802, 48
          %804 = vset.pattern.permute.xlu0 %v803
          %805 = vperm.xlu0 %804, %v764
          %v806 = vpop.permute.xlu0 %805
          %v807 = vlaneseq
          %v808 = vshrl.u32 %v807, 7
          %v809 = vadd.s32 %v808, 56
          %810 = vset.pattern.permute.xlu0 %v809
          %811 = vperm.xlu0 %810, %v764
          %v812 = vpop.permute.xlu0 %811
          %v813 = vlaneseq
          %v814 = vshrl.u32 %v813, 7
          %v815 = vadd.s32 %v814, 64
          %816 = vset.pattern.permute.xlu0 %v815
          %817 = vperm.xlu0 %816, %v764
          %v818 = vpop.permute.xlu0 %817
          %v819 = vlaneseq
          %v820 = vshrl.u32 %v819, 7
          %v821 = vadd.s32 %v820, 72
          %822 = vset.pattern.permute.xlu0 %v821
          %823 = vperm.xlu0 %822, %v764
          %v824 = vpop.permute.xlu0 %823
          %v825 = vlaneseq
          %v826 = vshrl.u32 %v825, 7
          %v827 = vadd.s32 %v826, 80
          %828 = vset.pattern.permute.xlu0 %v827
          %829 = vperm.xlu0 %828, %v764
          %v830 = vpop.permute.xlu0 %829
          %v831 = vlaneseq
          %v832 = vshrl.u32 %v831, 7
          %v833 = vadd.s32 %v832, 88
          %834 = vset.pattern.permute.xlu0 %v833
          %835 = vperm.xlu0 %834, %v764
          %v836 = vpop.permute.xlu0 %835
          %v837 = vlaneseq
          %v838 = vshrl.u32 %v837, 7
          %v839 = vadd.s32 %v838, 96
          %840 = vset.pattern.permute.xlu0 %v839
          %841 = vperm.xlu0 %840, %v764
          %v842 = vpop.permute.xlu0 %841
          %v843 = vlaneseq
          %v844 = vshrl.u32 %v843, 7
          %v845 = vadd.s32 %v844, 104
          %846 = vset.pattern.permute.xlu0 %v845
          %847 = vperm.xlu0 %846, %v764
          %v848 = vpop.permute.xlu0 %847
          %v849 = vlaneseq
          %v850 = vshrl.u32 %v849, 7
          %v851 = vadd.s32 %v850, 112
          %852 = vset.pattern.permute.xlu0 %v851
          %853 = vperm.xlu0 %852, %v764
          %v854 = vpop.permute.xlu0 %853
          %v855 = vlaneseq
          %v856 = vshrl.u32 %v855, 7
          %v857 = vadd.s32 %v856, 120
          %858 = vset.pattern.permute.xlu0 %v857
          %859 = vperm.xlu0 %858, %v764
          %v860 = vpop.permute.xlu0 %859
          %v861 = vperm.slane %v763, 1
          %v862 = vlaneseq
          %v863 = vshrl.u32 %v862, 7
          %865 = vset.pattern.permute.xlu0 %v863
          %866 = vperm.xlu0 %865, %v861
          %v867 = vpop.permute.xlu0 %866
          %v868 = vlaneseq
          %v869 = vshrl.u32 %v868, 7
          %v870 = vadd.s32 %v869, 8
          %871 = vset.pattern.permute.xlu0 %v870
          %872 = vperm.xlu0 %871, %v861
          %v873 = vpop.permute.xlu0 %872
          %v874 = vlaneseq
          %v875 = vshrl.u32 %v874, 7
          %v876 = vadd.s32 %v875, 16
          %877 = vset.pattern.permute.xlu0 %v876
          %878 = vperm.xlu0 %877, %v861
          %v879 = vpop.permute.xlu0 %878
          %v880 = vlaneseq
          %v881 = vshrl.u32 %v880, 7
          %v882 = vadd.s32 %v881, 24
          %883 = vset.pattern.permute.xlu0 %v882
          %884 = vperm.xlu0 %883, %v861
          %v885 = vpop.permute.xlu0 %884
          %v886 = vlaneseq
          %v887 = vshrl.u32 %v886, 7
          %v888 = vadd.s32 %v887, 32
          %889 = vset.pattern.permute.xlu0 %v888
          %890 = vperm.xlu0 %889, %v861
          %v891 = vpop.permute.xlu0 %890
          %v892 = vlaneseq
          %v893 = vshrl.u32 %v892, 7
          %v894 = vadd.s32 %v893, 40
          %895 = vset.pattern.permute.xlu0 %v894
          %896 = vperm.xlu0 %895, %v861
          %v897 = vpop.permute.xlu0 %896
          %v898 = vlaneseq
          %v899 = vshrl.u32 %v898, 7
          %v900 = vadd.s32 %v899, 48
          %901 = vset.pattern.permute.xlu0 %v900
          %902 = vperm.xlu0 %901, %v861
          %v903 = vpop.permute.xlu0 %902
          %v904 = vlaneseq
          %v905 = vshrl.u32 %v904, 7
          %v906 = vadd.s32 %v905, 56
          %907 = vset.pattern.permute.xlu0 %v906
          %908 = vperm.xlu0 %907, %v861
          %v909 = vpop.permute.xlu0 %908
          %v910 = vlaneseq
          %v911 = vshrl.u32 %v910, 7
          %v912 = vadd.s32 %v911, 64
          %913 = vset.pattern.permute.xlu0 %v912
          %914 = vperm.xlu0 %913, %v861
          %v915 = vpop.permute.xlu0 %914
          %v916 = vlaneseq
          %v917 = vshrl.u32 %v916, 7
          %v918 = vadd.s32 %v917, 72
          %919 = vset.pattern.permute.xlu0 %v918
          %920 = vperm.xlu0 %919, %v861
          %v921 = vpop.permute.xlu0 %920
          %v922 = vlaneseq
          %v923 = vshrl.u32 %v922, 7
          %v924 = vadd.s32 %v923, 80
          %925 = vset.pattern.permute.xlu0 %v924
          %926 = vperm.xlu0 %925, %v861
          %v927 = vpop.permute.xlu0 %926
          %v928 = vlaneseq
          %v929 = vshrl.u32 %v928, 7
          %v930 = vadd.s32 %v929, 88
          %931 = vset.pattern.permute.xlu0 %v930
          %932 = vperm.xlu0 %931, %v861
          %v933 = vpop.permute.xlu0 %932
          %v934 = vlaneseq
          %v935 = vshrl.u32 %v934, 7
          %v936 = vadd.s32 %v935, 96
          %937 = vset.pattern.permute.xlu0 %v936
          %938 = vperm.xlu0 %937, %v861
          %v939 = vpop.permute.xlu0 %938
          %v940 = vlaneseq
          %v941 = vshrl.u32 %v940, 7
          %v942 = vadd.s32 %v941, 104
          %943 = vset.pattern.permute.xlu0 %v942
          %944 = vperm.xlu0 %943, %v861
          %v945 = vpop.permute.xlu0 %944
          %v946 = vlaneseq
          %v947 = vshrl.u32 %v946, 7
          %v948 = vadd.s32 %v947, 112
          %949 = vset.pattern.permute.xlu0 %v948
          %950 = vperm.xlu0 %949, %v861
          %v951 = vpop.permute.xlu0 %950
          %v952 = vlaneseq
          %v953 = vshrl.u32 %v952, 7
          %v954 = vadd.s32 %v953, 120
          %955 = vset.pattern.permute.xlu0 %v954
          %956 = vperm.xlu0 %955, %v861
          %v957 = vpop.permute.xlu0 %956
          %v958 = vld [vmem:[#allocation2] sm:$0xff]
          %v959 = vld [vmem:[#allocation2 + $0x8] sm:$0xff]
          %v960 = vld [vmem:[#allocation2 + $0x10] sm:$0xff]
          %v961 = vld [vmem:[#allocation2 + $0x18] sm:$0xff]
          %v962 = vld [vmem:[#allocation2 + $0x20] sm:$0xff]
          %v963 = vld [vmem:[#allocation2 + $0x28] sm:$0xff]
          %v964 = vld [vmem:[#allocation2 + $0x30] sm:$0xff]
          %v965 = vld [vmem:[#allocation2 + $0x38] sm:$0xff]
          %v966 = vld [vmem:[#allocation2 + $0x40] sm:$0xff]
          %v967 = vld [vmem:[#allocation2 + $0x48] sm:$0xff]
          %v968 = vld [vmem:[#allocation2 + $0x50] sm:$0xff]
          %v969 = vld [vmem:[#allocation2 + $0x58] sm:$0xff]
          %v970 = vld [vmem:[#allocation2 + $0x60] sm:$0xff]
          %v971 = vld [vmem:[#allocation2 + $0x68] sm:$0xff]
          %v972 = vld [vmem:[#allocation2 + $0x70] sm:$0xff]
          %v973 = vld [vmem:[#allocation2 + $0x78] sm:$0xff]
          %v974 = vld [vmem:[#allocation2 + $0x80] sm:$0xff]
          %v975 = vld [vmem:[#allocation2 + $0x88] sm:$0xff]
          %v976 = vld [vmem:[#allocation2 + $0x90] sm:$0xff]
          %v977 = vld [vmem:[#allocation2 + $0x98] sm:$0xff]
          %v978 = vld [vmem:[#allocation2 + $0xa0] sm:$0xff]
          %v979 = vld [vmem:[#allocation2 + $0xa8] sm:$0xff]
          %v980 = vld [vmem:[#allocation2 + $0xb0] sm:$0xff]
          %v981 = vld [vmem:[#allocation2 + $0xb8] sm:$0xff]
          %v982 = vld [vmem:[#allocation2 + $0xc0] sm:$0xff]
          %v983 = vld [vmem:[#allocation2 + $0xc8] sm:$0xff]
          %v984 = vld [vmem:[#allocation2 + $0xd0] sm:$0xff]
          %v985 = vld [vmem:[#allocation2 + $0xd8] sm:$0xff]
          %v986 = vld [vmem:[#allocation2 + $0xe0] sm:$0xff]
          %v987 = vld [vmem:[#allocation2 + $0xe8] sm:$0xff]
          %v988 = vld [vmem:[#allocation2 + $0xf0] sm:$0xff]
          %v989 = vld [vmem:[#allocation2 + $0xf8] sm:$0xff]
          %v990 = vmul.f32 %v958, %v770
          %v991 = vmul.f32 %v959, %v776
          %v992 = vmul.f32 %v960, %v782
          %v993 = vmul.f32 %v961, %v788
          %v994 = vmul.f32 %v962, %v794
          %v995 = vmul.f32 %v963, %v800
          %v996 = vmul.f32 %v964, %v806
          %v997 = vmul.f32 %v965, %v812
          %v998 = vmul.f32 %v966, %v818
          %v999 = vmul.f32 %v967, %v824
          %v1000 = vmul.f32 %v968, %v830
          %v1001 = vmul.f32 %v969, %v836
          %v1002 = vmul.f32 %v970, %v842
          %v1003 = vmul.f32 %v971, %v848
          %v1004 = vmul.f32 %v972, %v854
          %v1005 = vmul.f32 %v973, %v860
          %v1006 = vmul.f32 %v974, %v867
          %v1007 = vmul.f32 %v975, %v873
          %v1008 = vmul.f32 %v976, %v879
          %v1009 = vmul.f32 %v977, %v885
          %v1010 = vmul.f32 %v978, %v891
          %v1011 = vmul.f32 %v979, %v897
          %v1012 = vmul.f32 %v980, %v903
          %v1013 = vmul.f32 %v981, %v909
          %v1014 = vmul.f32 %v982, %v915
          %v1015 = vmul.f32 %v983, %v921
          %v1016 = vmul.f32 %v984, %v927
          %v1017 = vmul.f32 %v985, %v933
          %v1018 = vmul.f32 %v986, %v939
          %v1019 = vmul.f32 %v987, %v945
          %v1020 = vmul.f32 %v988, %v951
          %v1021 = vmul.f32 %v989, %v957
          %1022 = vst [vmem:[%s255] sm:$0xff] %v990
          %1023 = vst [vmem:[%s255 + $0x8] sm:$0xff] %v991
          %1024 = vst [vmem:[%s255 + $0x10] sm:$0xff] %v992
          %1025 = vst [vmem:[%s255 + $0x18] sm:$0xff] %v993
          %1026 = vst [vmem:[%s255 + $0x20] sm:$0xff] %v994
          %1027 = vst [vmem:[%s255 + $0x28] sm:$0xff] %v995
          %1028 = vst [vmem:[%s255 + $0x30] sm:$0xff] %v996
          %1029 = vst [vmem:[%s255 + $0x38] sm:$0xff] %v997
          %1030 = vst [vmem:[%s255 + $0x40] sm:$0xff] %v998
          %1031 = vst [vmem:[%s255 + $0x48] sm:$0xff] %v999
          %1032 = vst [vmem:[%s255 + $0x50] sm:$0xff] %v1000
          %1033 = vst [vmem:[%s255 + $0x58] sm:$0xff] %v1001
          %1034 = vst [vmem:[%s255 + $0x60] sm:$0xff] %v1002
          %1035 = vst [vmem:[%s255 + $0x68] sm:$0xff] %v1003
          %1036 = vst [vmem:[%s255 + $0x70] sm:$0xff] %v1004
          %1037 = vst [vmem:[%s255 + $0x78] sm:$0xff] %v1005
          %1038 = vst [vmem:[%s255 + $0x80] sm:$0xff] %v1006
          %1039 = vst [vmem:[%s255 + $0x88] sm:$0xff] %v1007
          %1040 = vst [vmem:[%s255 + $0x90] sm:$0xff] %v1008
          %1041 = vst [vmem:[%s255 + $0x98] sm:$0xff] %v1009
          %1042 = vst [vmem:[%s255 + $0xa0] sm:$0xff] %v1010
          %1043 = vst [vmem:[%s255 + $0xa8] sm:$0xff] %v1011
          %1044 = vst [vmem:[%s255 + $0xb0] sm:$0xff] %v1012
          %1045 = vst [vmem:[%s255 + $0xb8] sm:$0xff] %v1013
          %1046 = vst [vmem:[%s255 + $0xc0] sm:$0xff] %v1014
          %1047 = vst [vmem:[%s255 + $0xc8] sm:$0xff] %v1015
          %1048 = vst [vmem:[%s255 + $0xd0] sm:$0xff] %v1016
          %1049 = vst [vmem:[%s255 + $0xd8] sm:$0xff] %v1017
          %1050 = vst [vmem:[%s255 + $0xe0] sm:$0xff] %v1018
          %1051 = vst [vmem:[%s255 + $0xe8] sm:$0xff] %v1019
          %1052 = vst [vmem:[%s255 + $0xf0] sm:$0xff] %v1020
          %1053 = vst [vmem:[%s255 + $0xf8] sm:$0xff] %v1021
        $region44: #{tpu_custom_call.1} parent=27 // pred_fallthru
          _
        %s1054 = sand.u32 %s105, 1
        %s1055 = scalar_lea.sflag [#allocation6], %s1054
        %s1056 = sand.u32 %s105, 1
        %s1057 = smul.addr %s1056, 256
        %s1058 = scalar_lea.vmem [#allocation9], %s1057
        // Predicated region
        $region45: #{tpu_custom_call.1} parent=27 // pred_check
          %p1059 = pneg %p115
        $region46: #{tpu_custom_call.1} parent=27 // pred_check_branch
          %1061 = sbr.rel (%p1059) target = $region48
        $region47: #{tpu_custom_call.1} parent=27 // pred_region
          #allocation13 [shape = 'u32[6]{0}', space=smem, size = 0x18, scoped, tag = 'DMA stride descriptor']
          %s1062 = smul.u32 2, %s28
          %s1063 = smul.u32 16, %s27
          %1065 = vsyncadd %s1055, 0
          %s1066 = smul.addr %s1062, 32
          %s1067 = sadd.s32 %s1063, %s1066
          %s1068 = smul.addr %s1067, 8
          %s1069 = scalar_lea.hbm %s2, %s1068
          %s1071 = sshll.u32 1, 14
          %s1072 = sxor.u32 4294967295, %s1071
          %s1075 = sshll.u32 7, 18
          %s1076 = sxor.u32 4294967295, %s1075
          %s1077 = sand.u32 0, %s1076
          %s1079 = sor.u32 %s1077, 0
          %s1080 = sshll.u32 %s1058, 4
          %s1081 = int_to_ptr.vmem [resolvable:$true] %s1080
          %s1082 = sshll.u32 %s1069, 4
          %s1083 = int_to_ptr.hbm [resolvable:$true] %s1082
          %1089 = sst [smem:[#allocation13]] 2048
          %s1090 = scalar_lea.smem [#allocation13], 1
          %1091 = sst [smem:[%s1090]] 4096
          %s1092 = scalar_lea.smem [#allocation13], 2
          %1093 = sst [smem:[%s1092]] 16
          %s1094 = scalar_lea.smem [#allocation13], 3
          %1095 = sst [smem:[%s1094]] 128
          %s1096 = scalar_lea.smem [#allocation13], 4
          %1097 = sst [smem:[%s1096]] 128
          %s1098 = scalar_lea.smem [#allocation13], 5
          %1099 = sst [smem:[%s1098]] 8
          %1101 = dma.general %s1081, 4096, %s1083, %s1055, [#allocation12], [#allocation13], %s1079, 0
        $region48: #{tpu_custom_call.1} parent=27 // pred_fallthru
          _
      $region28: #{tpu_custom_call.1} parent=5 // pred_fallthru
        _
      %p1102 = scmp.le.s32.totalorder 2, %s17
      // Predicated region
      $region49: #{tpu_custom_call.1} parent=5 // pred_check
        %p1103 = pneg %p1102
      $region50: #{tpu_custom_call.1} parent=5 // pred_check_branch
        %1105 = sbr.rel (%p1103) target = $region52
      $region51: #{tpu_custom_call.1} parent=5 // pred_region
        %s1106 = ssub.s32 %s17, 2
        // Predicated region
        $region53: #{tpu_custom_call.1} parent=51 // pred_check
          %p1107 = pneg %p121
        $region54: #{tpu_custom_call.1} parent=51 // pred_check_branch
          %1109 = sbr.rel (%p1107) target = $region56
        $region55: #{tpu_custom_call.1} parent=51 // pred_region
          %s1110 = sand.u32 %s106, 1
          %s1111 = scalar_lea.sflag [#allocation6], %s1110
          %s1112 = sand.u32 %s106, 1
          %s1113 = smul.addr %s1112, 256
          %s1114 = scalar_lea.vmem [#allocation9], %s1113
          %1116 = dma.done %s1111, 4096
        $region56: #{tpu_custom_call.1} parent=51 // pred_fallthru
          _
      $region52: #{tpu_custom_call.1} parent=5 // pred_fallthru
        _
    $region6: #{tpu_custom_call.1} parent=1 // loop_footer
      %s21 = sadd.s32 1, %s17
    $region7: #{tpu_custom_call.1} parent=1 // loop_footer_branch
      %16 = sbr.rel target = $region3
    $region8: #{tpu_custom_call.1} parent=1 // loop_exit
      _
    %1117 = vsyncpa [#allocation5], 1
    %s1118 = scalar_lea.sflag [#allocation5], 1
    %1119 = vsyncpa %s1118, 1
    %1120 = vsyncpa [#allocation8], 1
    %s1121 = scalar_lea.sflag [#allocation8], 1
    %1122 = vsyncpa %s1121, 1
    %1123 = vsyncpa [#allocation6], 1
    %s1124 = scalar_lea.sflag [#allocation6], 1
    %1125 = vsyncpa %s1124, 1

</llo_original>
